<compile_context>
chip_gen: v7x
topology: tpu7x:2x2x1
jax: 0.10.0
libtpu: 0.0.40
codegen_flags: <defaults>
</compile_context>

<pallas_src>
import functools
import math

import numpy as np
import jax
import jax.numpy as jnp
from jax import lax
from jax.experimental import pallas as pl
from jax.experimental.pallas import tpu as pltpu

_LANES = 128      # vreg lane width
_SUBLANES = 8     # f32 vreg sublane depth


@functools.lru_cache(maxsize=None)
def _make_surv_loss_kernel(n_rows: int):
    """Kernel for data packed as (2, n_rows, 128); n_rows is a static multiple of 8."""
    R = n_rows
    L = _LANES

    def kernel(n_ref, data_ref, out_ref):
        n_valid = n_ref[0]                 # dynamic element count (SMEM scalar)
        yhat = data_ref[0]                 # (R, L) f32, flat order = row-major
        y = data_ref[1]                    # (R, L) f32

        row = lax.broadcasted_iota(jnp.int32, (R, L), 0)
        lane = lax.broadcasted_iota(jnp.int32, (R, L), 1)
        idx = row * L + lane               # flattened position
        valid = idx < n_valid

        e = jnp.where(valid & (y > 0.0), 1.0, 0.0)   # event indicator
        t = jnp.abs(y)                               # survival time

        # ---- stabilized z = exp(yhat - max); exactly 0 on padding ------------------
        m = jnp.max(jnp.where(valid, yhat, -jnp.inf))
        z = jnp.exp(jnp.where(valid, yhat - m, -jnp.inf))

        # ---- within-row inclusive prefix sums on the MXU ---------------------------
        # z is split into bf16 hi/lo parts so the cumsum is f32-accurate regardless of
        # MXU multiplicand precision; e is {0,1} and exact as-is.
        z_hi = z.astype(jnp.bfloat16).astype(jnp.float32)
        z_lo = z - z_hi
        ki = lax.broadcasted_iota(jnp.int32, (L, L), 0)
        ji = lax.broadcasted_iota(jnp.int32, (L, L), 1)
        upper = jnp.where(ki <= ji, 1.0, 0.0)        # U[k, j] = 1 iff k <= j
        stacked = jnp.concatenate([z_hi, z_lo, e], axis=0)                 # (3R, L)
        cw = jnp.dot(stacked, upper, preferred_element_type=jnp.float32)   # (3R, L)
        zw = cw[:R] + cw[R:2 * R]      # within-row inclusive cumsum of z
        ew = cw[2 * R:]                # within-row inclusive cumsum of e

        # ---- row-total carries: one fused segmented sublane scan (XLU) -------------
        wt = jnp.concatenate([zw, ew], axis=0)                   # (2R, L)
        tot = jnp.broadcast_to(wt[:, L - 1:L], (2 * R, L))       # per-row totals
        rr = lax.broadcasted_iota(jnp.int32, (2 * R, L), 0)
        seg = jnp.where(rr >= R, rr - R, rr)                     # row index within its half
        c = tot
        d = 1
        while d < R:                                             # segmented Hillis-Steele
            c = c + jnp.where(seg >= d, pltpu.roll(c, shift=d, axis=0), 0.0)
            d *= 2
        carry = jnp.where(seg >= 1, pltpu.roll(c, shift=1, axis=0), 0.0)   # exclusive
        cum = wt + carry
        cum_z = cum[:R]                # flat inclusive cumsum of z
        cum_e = cum[R:]                # flat inclusive cumsum of e

        yhr = jnp.log(cum_z) + m       # log(cumsum(exp(Yhat))), stabilized

        # ---- tie-group ends: flat position i is an end iff T[i+1] != T[i] ----------
        t_lane = pltpu.roll(t, shift=L - 1, axis=1)              # t[r, j+1]   (lane wrap)
        t_wrap = pltpu.roll(t_lane, shift=R - 1, axis=0)         # t[r+1, 0] at lane L-1
        t_next = jnp.where(lane < L - 1, t_lane, t_wrap)
        is_end = valid & ((idx == n_valid - 1) | (t != t_next))
        end_cum_e = jnp.where(is_end, cum_e, 0.0)

        # ---- exclusive running max of end_cum_e (= cum_e at the previous group end)
        s = end_cum_e
        d = 1
        while d < L:                                             # lane-direction scan
            s = jnp.maximum(s, jnp.where(lane >= d, pltpu.roll(s, shift=d, axis=1), 0.0))
            d *= 2
        excl_lane = jnp.where(lane >= 1, pltpu.roll(s, shift=1, axis=1), 0.0)
        rowmax = jnp.broadcast_to(s[:, L - 1:L], (R, L))         # per-row maxima
        c2 = rowmax
        d = 1
        while d < R:                                             # sublane-direction scan
            c2 = jnp.maximum(c2, jnp.where(row >= d, pltpu.roll(c2, shift=d, axis=0), 0.0))
            d *= 2
        carry_m = jnp.where(row >= 1, pltpu.roll(c2, shift=1, axis=0), 0.0)
        prev_end_cum_e = jnp.maximum(excl_lane, carry_m)

        # ---- loss -------------------------------------------------------------------
        loss2 = jnp.sum(jnp.where(is_end, (cum_e - prev_end_cum_e) * yhr, 0.0))
        loss1 = jnp.sum(yhat * e)        # padded yhat is 0 and e is 0 there
        obs = jnp.sum(e)
        # NOTE: obs == 0 gives inf/nan, matching the PyTorch reference.
        out_ref[0, 0] = (loss2 - loss1) / obs

    return kernel


@jax.jit
def surv_loss(yhat, y):
    """Pallas implementation of SurvLoss.forward(Yhat, Y)."""
    yhat_v = jnp.reshape(yhat, (-1,)).astype(jnp.float32)
    y_v = jnp.reshape(y, (-1,)).astype(jnp.float32)
    n = y_v.shape[0]

    # TODO(synk): torch.argsort has no clean Pallas TPU equivalent; the sort + gathers
    # stay in XLA glue (O(N log N), dominates wall time for large N anyway).
    order = jnp.argsort(y_v)            # sort on *signed* Y, matching the reference
    y_s = y_v[order]
    yhat_s = yhat_v[order]

    rows = max(1, -(-n // _LANES))
    n_rows = -(-rows // _SUBLANES) * _SUBLANES        # bucket: multiple of 8 sublanes
    n_pad = n_rows * _LANES
    pad = n_pad - n

    data = jnp.stack([jnp.pad(yhat_s, (0, pad)), jnp.pad(y_s, (0, pad))])
    data = data.reshape(2, n_rows, _LANES)            # sublane-dense (8,128)-tiled pack
    n_arr = jnp.array([n], dtype=jnp.int32)           # dynamic length -> SMEM scalar

    out = pl.pallas_call(
        _make_surv_loss_kernel(n_rows),
        out_shape=jax.ShapeDtypeStruct((1, 1), jnp.float32),
        in_specs=[
            pl.BlockSpec(memory_space=pltpu.MemorySpace.SMEM),   # n_valid scalar
            pl.BlockSpec(memory_space=pltpu.MemorySpace.VMEM),   # stacked (yhat, y)
        ],
        out_specs=pl.BlockSpec(memory_space=pltpu.MemorySpace.SMEM),
        compiler_params=pltpu.CompilerParams(vmem_limit_bytes=32 * 1024 * 1024),
    )(n_arr, data)
    return out[0, 0]


def _ref_surv_loss(yhat, y):
    """Pure-numpy mirror of the PyTorch reference loop (for verification)."""
    yhat = np.asarray(yhat, dtype=np.float32).squeeze().reshape(-1)
    y = np.asarray(y, dtype=np.float32).squeeze().reshape(-1)
    order = np.argsort(y, kind="stable")
    y = y[order]
    yhat = yhat[order]
    E = (y > 0).astype(np.float32)
    T = np.abs(y)
    Yhr = np.log(np.cumsum(np.exp(yhat)))
    obs = E.sum()
    Es = np.zeros_like(E)
    Yhrs = np.zeros_like(Yhr)
    j = 0
    for i in range(1, len(T)):
        if T[i] != T[i - 1]:
            Es[i - 1] = E[j:i].sum()
            Yhrs[i - 1] = Yhr[j:i].max()
            j = i
    Es[-1] = E[j:].sum()
    Yhrs[-1] = Yhr[j:].max()
    loss2 = (Es * Yhrs).sum()
    loss1 = (yhat * E).sum()
    return (loss2 - loss1) / obs


def _run_case(key, n):
    k1, k2, k3 = jax.random.split(key, 3)
    # Yhat: predicted risk scores (N, 1); Y: signed survival labels (N,)
    #   Y > 0 -> event observed at time |Y| ; Y < 0 -> censored at time |Y|
    yhat = jax.random.normal(k1, (n, 1), dtype=jnp.float32)
    t = jax.random.randint(k2, (n,), 1, 5).astype(jnp.float32)   # small range -> ties
    event = jax.random.bernoulli(k3, 0.7, (n,))
    y = jnp.where(event, t, -t)
    y = y.at[0].set(jnp.abs(y[0]))   # ensure at least one event so obs > 0

    loss = surv_loss(yhat, y)
    jax.block_until_ready(loss)

    ref = _ref_surv_loss(np.asarray(yhat), np.asarray(y))
    assert np.allclose(np.asarray(loss), ref, rtol=1e-3, atol=1e-3), (n, float(loss), float(ref))


if __name__ == "__main__":
    key = jax.random.PRNGKey(0)
    ka, kb, kc = jax.random.split(key, 3)
    _run_case(ka, 8)       # single packed row used, rest padding
    _run_case(kb, 200)     # two rows -> cross-row group ends & row carries
    _run_case(kc, 1500)    # 12 rows -> 16-sublane bucket, multi-tile sublane scans
    print("KERNEL_OK")
</pallas_src>

<mosaic_0001>
module attributes {stable_mosaic.version = 11 : i64} {
  func.func @kernel(%arg0: memref<1xi32, #tpu.memory_space<smem>>, %arg1: memref<2x8x128xf32, #tpu.memory_space<vmem>>, %arg2: memref<1x1xf32, #tpu.memory_space<smem>>) attributes {dimension_semantics = [], scalar_prefetch = 0 : i64, scratch_operands = 0 : i64, tpu.core_type = #tpu.core_type<tc>} {
    %c0 = arith.constant 0 : index
    %0 = memref.load %arg0[%c0] : memref<1xi32, #tpu.memory_space<smem>>
    %c0_0 = arith.constant 0 : index
    %c0_1 = arith.constant 0 : index
    %c0_2 = arith.constant 0 : index
    %1 = vector.load %arg1[%c0_0, %c0_1, %c0_2] : memref<2x8x128xf32, #tpu.memory_space<vmem>>, vector<1x8x128xf32>
    %2 = vector.shape_cast %1 : vector<1x8x128xf32> to vector<8x128xf32>
    %c1 = arith.constant 1 : index
    %c0_3 = arith.constant 0 : index
    %c0_4 = arith.constant 0 : index
    %3 = vector.load %arg1[%c1, %c0_3, %c0_4] : memref<2x8x128xf32, #tpu.memory_space<vmem>>, vector<1x8x128xf32>
    %4 = vector.shape_cast %3 : vector<1x8x128xf32> to vector<8x128xf32>
    %5 = tpu.iota {dimensions = array<i32: 0>} : vector<8x128xi32>
    %6 = tpu.iota {dimensions = array<i32: 1>} : vector<8x128xi32>
    %c128_i32 = arith.constant 128 : i32
    %7 = vector.broadcast %c128_i32 : i32 to vector<8x128xi32>
    %8 = arith.muli %5, %7 : vector<8x128xi32>
    %9 = arith.addi %8, %6 : vector<8x128xi32>
    %10 = vector.broadcast %0 : i32 to vector<8x128xi32>
    %11 = arith.cmpi slt, %9, %10 : vector<8x128xi32>
    %cst = arith.constant 0.000000e+00 : f32
    %12 = vector.broadcast %cst : f32 to vector<8x128xf32>
    %13 = arith.cmpf ogt, %4, %12 : vector<8x128xf32>
    %14 = arith.andi %11, %13 : vector<8x128xi1>
    %cst_5 = arith.constant 1.000000e+00 : f32
    %cst_6 = arith.constant 0.000000e+00 : f32
    %15 = vector.broadcast %cst_5 : f32 to vector<8x128xf32>
    %16 = vector.broadcast %cst_6 : f32 to vector<8x128xf32>
    %17 = arith.select %14, %15, %16 : vector<8x128xi1>, vector<8x128xf32>
    %18 = math.absf %4 : vector<8x128xf32>
    %cst_7 = arith.constant 0xFF800000 : f32
    %19 = vector.broadcast %cst_7 : f32 to vector<8x128xf32>
    %20 = arith.select %11, %2, %19 : vector<8x128xi1>, vector<8x128xf32>
    %21 = vector.shape_cast %20 : vector<8x128xf32> to vector<1x8x128xf32>
    %cst_8 = arith.constant dense<0xFF800000> : vector<1xf32>
    %22 = vector.multi_reduction <maximumf>, %21, %cst_8 [1, 2] : vector<1x8x128xf32> to vector<1xf32>
    %23 = vector.shape_cast %22 : vector<1xf32> to vector<1x1x1xf32>
    %24 = vector.extract %23[0, 0, 0] : f32 from vector<1x1x1xf32>
    %25 = vector.broadcast %24 : f32 to vector<8x128xf32>
    %26 = arith.subf %2, %25 : vector<8x128xf32>
    %cst_9 = arith.constant 0xFF800000 : f32
    %27 = vector.broadcast %cst_9 : f32 to vector<8x128xf32>
    %28 = arith.select %11, %26, %27 : vector<8x128xi1>, vector<8x128xf32>
    %29 = math.exp %28 : vector<8x128xf32>
    %30 = arith.truncf %29 : vector<8x128xf32> to vector<8x128xbf16>
    %31 = arith.extf %30 : vector<8x128xbf16> to vector<8x128xf32>
    %32 = arith.subf %29, %31 : vector<8x128xf32>
    %33 = tpu.iota {dimensions = array<i32: 0>} : vector<128x128xi32>
    %34 = tpu.iota {dimensions = array<i32: 1>} : vector<128x128xi32>
    %35 = arith.cmpi sle, %33, %34 : vector<128x128xi32>
    %cst_10 = arith.constant 1.000000e+00 : f32
    %cst_11 = arith.constant 0.000000e+00 : f32
    %36 = vector.broadcast %cst_10 : f32 to vector<128x128xf32>
    %37 = vector.broadcast %cst_11 : f32 to vector<128x128xf32>
    %38 = arith.select %35, %36, %37 : vector<128x128xi1>, vector<128x128xf32>
    %39 = tpu.concatenate %31, %32, %17 in 0 : vector<8x128xf32>, vector<8x128xf32>, vector<8x128xf32> -> vector<24x128xf32>
    %cst_12 = arith.constant dense<0.000000e+00> : vector<24x128xf32>
    %40 = tpu.matmul %39, %38, %cst_12 {dimension_numbers = #tpu.dot_dimension_numbers<[1], [0], [0], [1], [0, 0, 1, 1], [], []>} : vector<24x128xf32>, vector<128x128xf32>, vector<24x128xf32> -> vector<24x128xf32>
    %41 = vector.extract_strided_slice %40 {offsets = [0, 0], sizes = [8, 128], strides = [1, 1]} : vector<24x128xf32> to vector<8x128xf32>
    %42 = vector.extract_strided_slice %40 {offsets = [8, 0], sizes = [8, 128], strides = [1, 1]} : vector<24x128xf32> to vector<8x128xf32>
    %43 = arith.addf %41, %42 : vector<8x128xf32>
    %44 = vector.extract_strided_slice %40 {offsets = [16, 0], sizes = [8, 128], strides = [1, 1]} : vector<24x128xf32> to vector<8x128xf32>
    %45 = tpu.concatenate %43, %44 in 0 : vector<8x128xf32>, vector<8x128xf32> -> vector<16x128xf32>
    %46 = vector.extract_strided_slice %45 {offsets = [0, 127], sizes = [16, 1], strides = [1, 1]} : vector<16x128xf32> to vector<16x1xf32>
    %47 = vector.shape_cast %46 : vector<16x1xf32> to vector<16x1xf32>
    %48 = vector.broadcast %47 : vector<16x1xf32> to vector<16x128xf32>
    %49 = tpu.iota {dimensions = array<i32: 0>} : vector<16x128xi32>
    %c8_i32 = arith.constant 8 : i32
    %50 = vector.broadcast %c8_i32 : i32 to vector<16x128xi32>
    %51 = arith.cmpi sge, %49, %50 : vector<16x128xi32>
    %c8_i32_13 = arith.constant 8 : i32
    %52 = vector.broadcast %c8_i32_13 : i32 to vector<16x128xi32>
    %53 = arith.subi %49, %52 : vector<16x128xi32>
    %54 = arith.select %51, %53, %49 : vector<16x128xi1>, vector<16x128xi32>
    %c1_i32 = arith.constant 1 : i32
    %55 = vector.broadcast %c1_i32 : i32 to vector<16x128xi32>
    %56 = arith.cmpi sge, %54, %55 : vector<16x128xi32>
    %c1_i32_14 = arith.constant 1 : i32
    %57 = tpu.dynamic_rotate %48 by %c1_i32_14 dim 0 : vector<16x128xf32>, i32 -> vector<16x128xf32>
    %cst_15 = arith.constant 0.000000e+00 : f32
    %58 = vector.broadcast %cst_15 : f32 to vector<16x128xf32>
    %59 = arith.select %56, %57, %58 : vector<16x128xi1>, vector<16x128xf32>
    %60 = arith.addf %48, %59 : vector<16x128xf32>
    %c2_i32 = arith.constant 2 : i32
    %61 = vector.broadcast %c2_i32 : i32 to vector<16x128xi32>
    %62 = arith.cmpi sge, %54, %61 : vector<16x128xi32>
    %c2_i32_16 = arith.constant 2 : i32
    %63 = tpu.dynamic_rotate %60 by %c2_i32_16 dim 0 : vector<16x128xf32>, i32 -> vector<16x128xf32>
    %cst_17 = arith.constant 0.000000e+00 : f32
    %64 = vector.broadcast %cst_17 : f32 to vector<16x128xf32>
    %65 = arith.select %62, %63, %64 : vector<16x128xi1>, vector<16x128xf32>
    %66 = arith.addf %60, %65 : vector<16x128xf32>
    %c4_i32 = arith.constant 4 : i32
    %67 = vector.broadcast %c4_i32 : i32 to vector<16x128xi32>
    %68 = arith.cmpi sge, %54, %67 : vector<16x128xi32>
    %c4_i32_18 = arith.constant 4 : i32
    %69 = tpu.dynamic_rotate %66 by %c4_i32_18 dim 0 : vector<16x128xf32>, i32 -> vector<16x128xf32>
    %cst_19 = arith.constant 0.000000e+00 : f32
    %70 = vector.broadcast %cst_19 : f32 to vector<16x128xf32>
    %71 = arith.select %68, %69, %70 : vector<16x128xi1>, vector<16x128xf32>
    %72 = arith.addf %66, %71 : vector<16x128xf32>
    %c1_i32_20 = arith.constant 1 : i32
    %73 = vector.broadcast %c1_i32_20 : i32 to vector<16x128xi32>
    %74 = arith.cmpi sge, %54, %73 : vector<16x128xi32>
    %c1_i32_21 = arith.constant 1 : i32
    %75 = tpu.dynamic_rotate %72 by %c1_i32_21 dim 0 : vector<16x128xf32>, i32 -> vector<16x128xf32>
    %cst_22 = arith.constant 0.000000e+00 : f32
    %76 = vector.broadcast %cst_22 : f32 to vector<16x128xf32>
    %77 = arith.select %74, %75, %76 : vector<16x128xi1>, vector<16x128xf32>
    %78 = arith.addf %45, %77 : vector<16x128xf32>
    %79 = vector.extract_strided_slice %78 {offsets = [0, 0], sizes = [8, 128], strides = [1, 1]} : vector<16x128xf32> to vector<8x128xf32>
    %80 = vector.extract_strided_slice %78 {offsets = [8, 0], sizes = [8, 128], strides = [1, 1]} : vector<16x128xf32> to vector<8x128xf32>
    %81 = math.log %79 : vector<8x128xf32>
    %82 = vector.broadcast %24 : f32 to vector<8x128xf32>
    %83 = arith.addf %81, %82 : vector<8x128xf32>
    %c127_i32 = arith.constant 127 : i32
    %84 = tpu.dynamic_rotate %18 by %c127_i32 dim 1 : vector<8x128xf32>, i32 -> vector<8x128xf32>
    %c7_i32 = arith.constant 7 : i32
    %85 = tpu.dynamic_rotate %84 by %c7_i32 dim 0 : vector<8x128xf32>, i32 -> vector<8x128xf32>
    %c127_i32_23 = arith.constant 127 : i32
    %86 = vector.broadcast %c127_i32_23 : i32 to vector<8x128xi32>
    %87 = arith.cmpi slt, %6, %86 : vector<8x128xi32>
    %88 = arith.select %87, %84, %85 : vector<8x128xi1>, vector<8x128xf32>
    %c1_i32_24 = arith.constant 1 : i32
    %89 = arith.subi %0, %c1_i32_24 : i32
    %90 = vector.broadcast %89 : i32 to vector<8x128xi32>
    %91 = arith.cmpi eq, %9, %90 : vector<8x128xi32>
    %92 = arith.cmpf one, %18, %88 : vector<8x128xf32>
    %93 = arith.ori %91, %92 : vector<8x128xi1>
    %94 = arith.andi %11, %93 : vector<8x128xi1>
    %cst_25 = arith.constant 0.000000e+00 : f32
    %95 = vector.broadcast %cst_25 : f32 to vector<8x128xf32>
    %96 = arith.select %94, %80, %95 : vector<8x128xi1>, vector<8x128xf32>
    %c1_i32_26 = arith.constant 1 : i32
    %97 = vector.broadcast %c1_i32_26 : i32 to vector<8x128xi32>
    %98 = arith.cmpi sge, %6, %97 : vector<8x128xi32>
    %c1_i32_27 = arith.constant 1 : i32
    %99 = tpu.dynamic_rotate %96 by %c1_i32_27 dim 1 : vector<8x128xf32>, i32 -> vector<8x128xf32>
    %cst_28 = arith.constant 0.000000e+00 : f32
    %100 = vector.broadcast %cst_28 : f32 to vector<8x128xf32>
    %101 = arith.select %98, %99, %100 : vector<8x128xi1>, vector<8x128xf32>
    %102 = arith.maximumf %96, %101 : vector<8x128xf32>
    %c2_i32_29 = arith.constant 2 : i32
    %103 = vector.broadcast %c2_i32_29 : i32 to vector<8x128xi32>
    %104 = arith.cmpi sge, %6, %103 : vector<8x128xi32>
    %c2_i32_30 = arith.constant 2 : i32
    %105 = tpu.dynamic_rotate %102 by %c2_i32_30 dim 1 : vector<8x128xf32>, i32 -> vector<8x128xf32>
    %cst_31 = arith.constant 0.000000e+00 : f32
    %106 = vector.broadcast %cst_31 : f32 to vector<8x128xf32>
    %107 = arith.select %104, %105, %106 : vector<8x128xi1>, vector<8x128xf32>
    %108 = arith.maximumf %102, %107 : vector<8x128xf32>
    %c4_i32_32 = arith.constant 4 : i32
    %109 = vector.broadcast %c4_i32_32 : i32 to vector<8x128xi32>
    %110 = arith.cmpi sge, %6, %109 : vector<8x128xi32>
    %c4_i32_33 = arith.constant 4 : i32
    %111 = tpu.dynamic_rotate %108 by %c4_i32_33 dim 1 : vector<8x128xf32>, i32 -> vector<8x128xf32>
    %cst_34 = arith.constant 0.000000e+00 : f32
    %112 = vector.broadcast %cst_34 : f32 to vector<8x128xf32>
    %113 = arith.select %110, %111, %112 : vector<8x128xi1>, vector<8x128xf32>
    %114 = arith.maximumf %108, %113 : vector<8x128xf32>
    %c8_i32_35 = arith.constant 8 : i32
    %115 = vector.broadcast %c8_i32_35 : i32 to vector<8x128xi32>
    %116 = arith.cmpi sge, %6, %115 : vector<8x128xi32>
    %c8_i32_36 = arith.constant 8 : i32
    %117 = tpu.dynamic_rotate %114 by %c8_i32_36 dim 1 : vector<8x128xf32>, i32 -> vector<8x128xf32>
    %cst_37 = arith.constant 0.000000e+00 : f32
    %118 = vector.broadcast %cst_37 : f32 to vector<8x128xf32>
    %119 = arith.select %116, %117, %118 : vector<8x128xi1>, vector<8x128xf32>
    %120 = arith.maximumf %114, %119 : vector<8x128xf32>
    %c16_i32 = arith.constant 16 : i32
    %121 = vector.broadcast %c16_i32 : i32 to vector<8x128xi32>
    %122 = arith.cmpi sge, %6, %121 : vector<8x128xi32>
    %c16_i32_38 = arith.constant 16 : i32
    %123 = tpu.dynamic_rotate %120 by %c16_i32_38 dim 1 : vector<8x128xf32>, i32 -> vector<8x128xf32>
    %cst_39 = arith.constant 0.000000e+00 : f32
    %124 = vector.broadcast %cst_39 : f32 to vector<8x128xf32>
    %125 = arith.select %122, %123, %124 : vector<8x128xi1>, vector<8x128xf32>
    %126 = arith.maximumf %120, %125 : vector<8x128xf32>
    %c32_i32 = arith.constant 32 : i32
    %127 = vector.broadcast %c32_i32 : i32 to vector<8x128xi32>
    %128 = arith.cmpi sge, %6, %127 : vector<8x128xi32>
    %c32_i32_40 = arith.constant 32 : i32
    %129 = tpu.dynamic_rotate %126 by %c32_i32_40 dim 1 : vector<8x128xf32>, i32 -> vector<8x128xf32>
    %cst_41 = arith.constant 0.000000e+00 : f32
    %130 = vector.broadcast %cst_41 : f32 to vector<8x128xf32>
    %131 = arith.select %128, %129, %130 : vector<8x128xi1>, vector<8x128xf32>
    %132 = arith.maximumf %126, %131 : vector<8x128xf32>
    %c64_i32 = arith.constant 64 : i32
    %133 = vector.broadcast %c64_i32 : i32 to vector<8x128xi32>
    %134 = arith.cmpi sge, %6, %133 : vector<8x128xi32>
    %c64_i32_42 = arith.constant 64 : i32
    %135 = tpu.dynamic_rotate %132 by %c64_i32_42 dim 1 : vector<8x128xf32>, i32 -> vector<8x128xf32>
    %cst_43 = arith.constant 0.000000e+00 : f32
    %136 = vector.broadcast %cst_43 : f32 to vector<8x128xf32>
    %137 = arith.select %134, %135, %136 : vector<8x128xi1>, vector<8x128xf32>
    %138 = arith.maximumf %132, %137 : vector<8x128xf32>
    %c1_i32_44 = arith.constant 1 : i32
    %139 = vector.broadcast %c1_i32_44 : i32 to vector<8x128xi32>
    %140 = arith.cmpi sge, %6, %139 : vector<8x128xi32>
    %c1_i32_45 = arith.constant 1 : i32
    %141 = tpu.dynamic_rotate %138 by %c1_i32_45 dim 1 : vector<8x128xf32>, i32 -> vector<8x128xf32>
    %cst_46 = arith.constant 0.000000e+00 : f32
    %142 = vector.broadcast %cst_46 : f32 to vector<8x128xf32>
    %143 = arith.select %140, %141, %142 : vector<8x128xi1>, vector<8x128xf32>
    %144 = vector.extract_strided_slice %138 {offsets = [0, 127], sizes = [8, 1], strides = [1, 1]} : vector<8x128xf32> to vector<8x1xf32>
    %145 = vector.shape_cast %144 : vector<8x1xf32> to vector<8x1xf32>
    %146 = vector.broadcast %145 : vector<8x1xf32> to vector<8x128xf32>
    %c1_i32_47 = arith.constant 1 : i32
    %147 = vector.broadcast %c1_i32_47 : i32 to vector<8x128xi32>
    %148 = arith.cmpi sge, %5, %147 : vector<8x128xi32>
    %c1_i32_48 = arith.constant 1 : i32
    %149 = tpu.dynamic_rotate %146 by %c1_i32_48 dim 0 : vector<8x128xf32>, i32 -> vector<8x128xf32>
    %cst_49 = arith.constant 0.000000e+00 : f32
    %150 = vector.broadcast %cst_49 : f32 to vector<8x128xf32>
    %151 = arith.select %148, %149, %150 : vector<8x128xi1>, vector<8x128xf32>
    %152 = arith.maximumf %146, %151 : vector<8x128xf32>
    %c2_i32_50 = arith.constant 2 : i32
    %153 = vector.broadcast %c2_i32_50 : i32 to vector<8x128xi32>
    %154 = arith.cmpi sge, %5, %153 : vector<8x128xi32>
    %c2_i32_51 = arith.constant 2 : i32
    %155 = tpu.dynamic_rotate %152 by %c2_i32_51 dim 0 : vector<8x128xf32>, i32 -> vector<8x128xf32>
    %cst_52 = arith.constant 0.000000e+00 : f32
    %156 = vector.broadcast %cst_52 : f32 to vector<8x128xf32>
    %157 = arith.select %154, %155, %156 : vector<8x128xi1>, vector<8x128xf32>
    %158 = arith.maximumf %152, %157 : vector<8x128xf32>
    %c4_i32_53 = arith.constant 4 : i32
    %159 = vector.broadcast %c4_i32_53 : i32 to vector<8x128xi32>
    %160 = arith.cmpi sge, %5, %159 : vector<8x128xi32>
    %c4_i32_54 = arith.constant 4 : i32
    %161 = tpu.dynamic_rotate %158 by %c4_i32_54 dim 0 : vector<8x128xf32>, i32 -> vector<8x128xf32>
    %cst_55 = arith.constant 0.000000e+00 : f32
    %162 = vector.broadcast %cst_55 : f32 to vector<8x128xf32>
    %163 = arith.select %160, %161, %162 : vector<8x128xi1>, vector<8x128xf32>
    %164 = arith.maximumf %158, %163 : vector<8x128xf32>
    %c1_i32_56 = arith.constant 1 : i32
    %165 = vector.broadcast %c1_i32_56 : i32 to vector<8x128xi32>
    %166 = arith.cmpi sge, %5, %165 : vector<8x128xi32>
    %c1_i32_57 = arith.constant 1 : i32
    %167 = tpu.dynamic_rotate %164 by %c1_i32_57 dim 0 : vector<8x128xf32>, i32 -> vector<8x128xf32>
    %cst_58 = arith.constant 0.000000e+00 : f32
    %168 = vector.broadcast %cst_58 : f32 to vector<8x128xf32>
    %169 = arith.select %166, %167, %168 : vector<8x128xi1>, vector<8x128xf32>
    %170 = arith.maximumf %143, %169 : vector<8x128xf32>
    %171 = arith.subf %80, %170 : vector<8x128xf32>
    %172 = arith.mulf %171, %83 : vector<8x128xf32>
    %cst_59 = arith.constant 0.000000e+00 : f32
    %173 = vector.broadcast %cst_59 : f32 to vector<8x128xf32>
    %174 = arith.select %94, %172, %173 : vector<8x128xi1>, vector<8x128xf32>
    %175 = vector.shape_cast %174 : vector<8x128xf32> to vector<1x8x128xf32>
    %cst_60 = arith.constant dense<0.000000e+00> : vector<1xf32>
    %176 = vector.multi_reduction <add>, %175, %cst_60 [1, 2] : vector<1x8x128xf32> to vector<1xf32>
    %177 = vector.shape_cast %176 : vector<1xf32> to vector<1x1x1xf32>
    %178 = vector.extract %177[0, 0, 0] : f32 from vector<1x1x1xf32>
    %179 = arith.mulf %2, %17 : vector<8x128xf32>
    %180 = vector.shape_cast %179 : vector<8x128xf32> to vector<1x8x128xf32>
    %cst_61 = arith.constant dense<0.000000e+00> : vector<1xf32>
    %181 = vector.multi_reduction <add>, %180, %cst_61 [1, 2] : vector<1x8x128xf32> to vector<1xf32>
    %182 = vector.shape_cast %181 : vector<1xf32> to vector<1x1x1xf32>
    %183 = vector.extract %182[0, 0, 0] : f32 from vector<1x1x1xf32>
    %184 = vector.shape_cast %17 : vector<8x128xf32> to vector<1x8x128xf32>
    %cst_62 = arith.constant dense<0.000000e+00> : vector<1xf32>
    %185 = vector.multi_reduction <add>, %184, %cst_62 [1, 2] : vector<1x8x128xf32> to vector<1xf32>
    %186 = vector.shape_cast %185 : vector<1xf32> to vector<1x1x1xf32>
    %187 = vector.extract %186[0, 0, 0] : f32 from vector<1x1x1xf32>
    %188 = arith.subf %178, %183 : f32
    %189 = arith.divf %188, %187 : f32
    %c0_63 = arith.constant 0 : index
    %c0_64 = arith.constant 0 : index
    %190 = memref.load %arg2[%c0_63, %c0_64] : memref<1x1xf32, #tpu.memory_space<smem>>
    memref.store %189, %arg2[%c0_63, %c0_64] : memref<1x1xf32, #tpu.memory_space<smem>>
    return
  }
}

</mosaic_0001>

<llo_original>
// kernel: surv_loss.1
$region0: #{surv_loss.1}
  #allocation0 [shape = 'u32[]', space=smem, size = 0x4, offset = 0x4, fixed_abs, tag = 'smem constant byte address 0x4 - core index']
  #allocation1 [shape = 'u32[144,128]{1,0:T(1,128)}', space=vmem, size = 0x12000, scoped, tag = 'internal scratch']
  #allocation2 [shape = 's32[1]{0:T(128)S(6)}', space=smem, size = 0x200, scoped, tag = 'scoped memory for surv_loss.1']
  %s0 = inlined_call_operand.<no memory space> [shape: s32[1], index: 0, kind: input, shape index: {}]
  %s1 = inlined_call_operand.vmem [shape: f32[2,8,128], index: 1, kind: input, shape index: {}]
  %s2 = inlined_call_operand.hbm [shape: f32[1,1], index: 2, kind: output, shape index: {}]
  %s3 = sld [smem:[#allocation0]]
  $region18: #{surv_loss.1} parent=0
    _
  %s5 = ssub.s32 1, %s3
  %s6 = scalar_select 0, %s5, %s3
  %7 = sst [smem:[#allocation2]] %s0
  $region1: #{surv_loss.1} parent=0
    #allocation3 [shape = 'u8[512]{0}', space=smem, size = 0x200, scoped, tag = 'output window, operand 0, single buffered']
    #allocation4 [shape = 's32[1]{0}', space=sflag, size = 0x4, scoped, tag = 'scoped memory for surv_loss.1']
    %8 = vsyncpa [#allocation4], 0
    // Predicated region
    $region2: #{surv_loss.1} parent=1 // pred_check
      _
    $region3: #{surv_loss.1} parent=1 // pred_check_branch
      %10 = sbr.rel (0) target = $region5
    $region4: #{surv_loss.1} parent=1 // pred_region
      _
    $region5: #{surv_loss.1} parent=1 // pred_fallthru
      _
    // Predicated region
    $region6: #{surv_loss.1} parent=1 // pred_check
      _
    $region7: #{surv_loss.1} parent=1 // pred_check_branch
      %12 = sbr.rel (0) target = $region9
    $region8: #{surv_loss.1} parent=1 // pred_region
      _
    $region9: #{surv_loss.1} parent=1 // pred_fallthru
      _
    %s13 = sld [smem:[#allocation2]]
    %v14 = vld [vmem:[%s1] sm:$0xff]
    %s15 = scalar_lea.vmem %s1, 8
    %v16 = vld [vmem:[%s15] sm:$0xff]
    %v17 = vlaneseq
    %v18 = vshrl.u32 %v17, 7
    %v19 = vlaneseq
    %v20 = vand.u32 %v19, 127
    %v21 = vmul.u32 %v18, 128
    %v22 = vadd.s32 %v21, %v20
    %v23 = vstv %s13
    %vm24 = vcmp.lt.s32.totalorder %v22, %v23
    %vm25 = vcmp.gt.f32.partialorder %v16, 0.0
    %vm26 = vmand %vm24, %vm25
    %v27 = vsel %vm26, 1.0, 0.0
    %v28 = vand.u32 2147483647, %v16
    %v29 = vsel %vm24, %v14, -inf
    %30 = vmax.xlane.f32.xlu0 %v29
    %v31 = vpop.xlane.xlu0 %30
    %v32 = vrot.slane %v31, 4
    %v33 = vmax.f32 %v31, %v32
    %v34 = vrot.slane %v33, 2
    %v35 = vmax.f32 %v33, %v34
    %v36 = vrot.slane %v35, 1
    %v37 = vmax.f32 %v35, %v36
    %s38 = vtos %v37
    %v39 = vstv %s38
    %v40 = vsub.f32 %v14, %v39
    %v41 = vsel %vm24, %v40, -inf
    %v42 = vmul.f32 %v41, 1.442695
    %v43 = vpow.pop %v42
    %v44 = vpack.c.bf16 %v43, %v43
    %v45 = vunpack.c.l.bf16 %v44
    %v46 = vsub.f32 %v43, %v45
    %v47 = vadd.s32 %v18, 8
    %v48 = vadd.s32 %v18, 16
    %v49 = vadd.s32 %v18, 24
    %v50 = vadd.s32 %v18, 32
    %v51 = vadd.s32 %v18, 40
    %v52 = vadd.s32 %v18, 48
    %v53 = vadd.s32 %v18, 56
    %v54 = vadd.s32 %v18, 64
    %v55 = vadd.s32 %v18, 72
    %v56 = vadd.s32 %v18, 80
    %v57 = vadd.s32 %v18, 88
    %v58 = vadd.s32 %v18, 96
    %v59 = vadd.s32 %v18, 104
    %v60 = vadd.s32 %v18, 112
    %v61 = vadd.s32 %v18, 120
    %vm62 = vcmp.le.s32.totalorder %v18, %v20
    %vm63 = vcmp.le.s32.totalorder %v47, %v20
    %vm64 = vcmp.le.s32.totalorder %v48, %v20
    %vm65 = vcmp.le.s32.totalorder %v49, %v20
    %vm66 = vcmp.le.s32.totalorder %v50, %v20
    %vm67 = vcmp.le.s32.totalorder %v51, %v20
    %vm68 = vcmp.le.s32.totalorder %v52, %v20
    %vm69 = vcmp.le.s32.totalorder %v53, %v20
    %vm70 = vcmp.le.s32.totalorder %v54, %v20
    %vm71 = vcmp.le.s32.totalorder %v55, %v20
    %vm72 = vcmp.le.s32.totalorder %v56, %v20
    %vm73 = vcmp.le.s32.totalorder %v57, %v20
    %vm74 = vcmp.le.s32.totalorder %v58, %v20
    %vm75 = vcmp.le.s32.totalorder %v59, %v20
    %vm76 = vcmp.le.s32.totalorder %v60, %v20
    %vm77 = vcmp.le.s32.totalorder %v61, %v20
    %v78 = vsel %vm62, 1.0, 0.0
    %v79 = vsel %vm63, 1.0, 0.0
    %v80 = vsel %vm64, 1.0, 0.0
    %v81 = vsel %vm65, 1.0, 0.0
    %v82 = vsel %vm66, 1.0, 0.0
    %v83 = vsel %vm67, 1.0, 0.0
    %v84 = vsel %vm68, 1.0, 0.0
    %v85 = vsel %vm69, 1.0, 0.0
    %v86 = vsel %vm70, 1.0, 0.0
    %v87 = vsel %vm71, 1.0, 0.0
    %v88 = vsel %vm72, 1.0, 0.0
    %v89 = vsel %vm73, 1.0, 0.0
    %v90 = vsel %vm74, 1.0, 0.0
    %v91 = vsel %vm75, 1.0, 0.0
    %v92 = vsel %vm76, 1.0, 0.0
    %v93 = vsel %vm77, 1.0, 0.0
    %94 = vmatprep.subr.mxu0 0.0
    %95 = vmatpush1.msra.mxu0 %v78
    %96 = vmatprep.subr.mxu0 0.0
    %97 = vmatpush1.msra.mxu0 %v79
    %98 = vmatprep.subr.mxu0 0.0
    %99 = vmatpush1.msra.mxu0 %v80
    %100 = vmatprep.subr.mxu0 0.0
    %101 = vmatpush1.msra.mxu0 %v81
    %102 = vmatprep.subr.mxu0 0.0
    %103 = vmatpush1.msra.mxu0 %v82
    %104 = vmatprep.subr.mxu0 0.0
    %105 = vmatpush1.msra.mxu0 %v83
    %106 = vmatprep.subr.mxu0 0.0
    %107 = vmatpush1.msra.mxu0 %v84
    %108 = vmatprep.subr.mxu0 0.0
    %109 = vmatpush1.msra.mxu0 %v85
    %110 = vmatprep.subr.mxu0 0.0
    %111 = vmatpush1.msra.mxu0 %v86
    %112 = vmatprep.subr.mxu0 0.0
    %113 = vmatpush1.msra.mxu0 %v87
    %114 = vmatprep.subr.mxu0 0.0
    %115 = vmatpush1.msra.mxu0 %v88
    %116 = vmatprep.subr.mxu0 0.0
    %117 = vmatpush1.msra.mxu0 %v89
    %118 = vmatprep.subr.mxu0 0.0
    %119 = vmatpush1.msra.mxu0 %v90
    %120 = vmatprep.subr.mxu0 0.0
    %121 = vmatpush1.msra.mxu0 %v91
    %122 = vmatprep.subr.mxu0 0.0
    %123 = vmatpush1.msra.mxu0 %v92
    %124 = vmatprep.subr.mxu0 0.0
    %125 = vmatpush1.msra.mxu0 %v93
    %126 = vmatprep.subr.mxu0 0.0
    %127 = vmatpush1.msra.mxu0 0.0
    %128 = vmatprep.subr.mxu0 0.0
    %129 = vmatpush1.msra.mxu0 0.0
    %130 = vmatprep.subr.mxu0 0.0
    %131 = vmatpush1.msra.mxu0 0.0
    %132 = vmatprep.subr.mxu0 0.0
    %133 = vmatpush1.msra.mxu0 0.0
    %134 = vmatprep.subr.mxu0 0.0
    %135 = vmatpush1.msra.mxu0 0.0
    %136 = vmatprep.subr.mxu0 0.0
    %137 = vmatpush1.msra.mxu0 0.0
    %138 = vmatprep.subr.mxu0 0.0
    %139 = vmatpush1.msra.mxu0 0.0
    %140 = vmatprep.subr.mxu0 0.0
    %141 = vmatpush1.msra.mxu0 0.0
    %142 = vmatprep.subr.mxu0 0.0
    %143 = vmatpush1.msra.mxu0 0.0
    %144 = vmatprep.subr.mxu0 0.0
    %145 = vmatpush1.msra.mxu0 0.0
    %146 = vmatprep.subr.mxu0 0.0
    %147 = vmatpush1.msra.mxu0 0.0
    %148 = vmatprep.subr.mxu0 0.0
    %149 = vmatpush1.msra.mxu0 0.0
    %150 = vmatprep.subr.mxu0 0.0
    %151 = vmatpush1.msra.mxu0 0.0
    %152 = vmatprep.subr.mxu0 0.0
    %153 = vmatpush1.msra.mxu0 0.0
    %154 = vmatprep.subr.mxu0 0.0
    %155 = vmatpush1.msra.mxu0 0.0
    %156 = vmatprep.subr.mxu0 0.0
    %157 = vmatpush1.msra.mxu0 0.0
    %158 = vmatprep.mubr.f32.mxu0 0.0
    %159 = vmatmul.mubr.f32.gmra.mrb[0].mxu0 %v45
    %v160 = vpop.f32.mrb[0].mxu0
    %v161 = vadd.f32 0.0, %v160
    %v162 = vpop.f32.mrb[0].mxu0
    %163 = vmatprep.mubr.f32.mxu0 0.0
    %164 = vmatmul.mubr.f32.gmra.mrb[0].mxu0 %v46
    %v165 = vpop.f32.mrb[0].mxu0
    %v166 = vadd.f32 0.0, %v165
    %v167 = vpop.f32.mrb[0].mxu0
    %168 = vmatprep.mubr.f32.mxu0 0.0
    %169 = vmatmul.mubr.f32.gmra.mrb[0].mxu0 %v27
    %v170 = vpop.f32.mrb[0].mxu0
    %v171 = vadd.f32 0.0, %v170
    %v172 = vpop.f32.mrb[0].mxu0
    %173 = vdwg.mxu0
    %v174 = vadd.f32 %v161, %v166
    %176 = vset.pattern.permute.xlu0 127
    %177 = vperm.xlu0 %176, %v174
    %v178 = vpop.permute.xlu0 %177
    %181 = vset.pattern.permute.xlu0 127
    %182 = vperm.xlu0 %181, %v171
    %v183 = vpop.permute.xlu0 %182
    %vm185 = vcmp.ge.s32.totalorder %v18, 8
    %vm186 = vcmp.ge.s32.totalorder %v47, 8
    %v187 = vsub.s32 %v18, 8
    %v188 = vsel %vm185, %v187, %v18
    %v189 = vsel %vm186, %v18, %v47
    %vm190 = vcmp.ge.s32.totalorder %v188, 1
    %vm191 = vcmp.ge.s32.totalorder %v189, 1
    %v192 = vrot.slane %v178, 7
    %v193 = vrot.slane %v183, 7
    %vm194 = vcmp.lt.s32.totalorder %v18, 1
    %v195 = vsel %vm194, %v192, %v193
    %v196 = vsel %vm194, %v193, %v192
    %v197 = vsel %vm190, %v196, 0.0
    %v198 = vsel %vm191, %v195, 0.0
    %v199 = vadd.f32 %v178, %v197
    %v200 = vadd.f32 %v183, %v198
    %vm201 = vcmp.ge.s32.totalorder %v188, 2
    %vm202 = vcmp.ge.s32.totalorder %v189, 2
    %v203 = vrot.slane %v199, 6
    %v204 = vrot.slane %v200, 6
    %vm205 = vcmp.lt.s32.totalorder %v18, 2
    %v206 = vsel %vm205, %v203, %v204
    %v207 = vsel %vm205, %v204, %v203
    %v208 = vsel %vm201, %v207, 0.0
    %v209 = vsel %vm202, %v206, 0.0
    %v210 = vadd.f32 %v199, %v208
    %v211 = vadd.f32 %v200, %v209
    %vm212 = vcmp.ge.s32.totalorder %v188, 4
    %vm213 = vcmp.ge.s32.totalorder %v189, 4
    %v214 = vrot.slane %v210, 4
    %v215 = vrot.slane %v211, 4
    %vm216 = vcmp.lt.s32.totalorder %v18, 4
    %v217 = vsel %vm216, %v214, %v215
    %v218 = vsel %vm216, %v215, %v214
    %v219 = vsel %vm212, %v218, 0.0
    %v220 = vsel %vm213, %v217, 0.0
    %v221 = vadd.f32 %v210, %v219
    %v222 = vadd.f32 %v211, %v220
    %v223 = vrot.slane %v221, 7
    %v224 = vrot.slane %v222, 7
    %v225 = vsel %vm194, %v223, %v224
    %v226 = vsel %vm194, %v224, %v223
    %v227 = vsel %vm190, %v226, 0.0
    %v228 = vsel %vm191, %v225, 0.0
    %v229 = vadd.f32 %v174, %v227
    %v230 = vadd.f32 %v171, %v228
    %v231 = vlog2.pop %v229
    %v232 = vmul.f32 %v231, 0.6931472
    %v233 = vadd.f32 %v232, %v39
    %234 = vrot.lane.b32.xlu0 %v28, 127
    %v235 = vpop.permute.xlu0 %234
    %v236 = vrot.slane %v235, 1
    %vm237 = vcmp.lt.s32.totalorder %v20, 127
    %v238 = vsel %vm237, %v235, %v236
    %s239 = ssub.s32 %s13, 1
    %v240 = vstv %s239
    %vm241 = vcmp.eq.s32.totalorder %v22, %v240
    %vm242 = vcmp.ne.f32.partialorder %v28, %v238
    %vm243 = vmor %vm241, %vm242
    %vm244 = vmand %vm24, %vm243
    %v245 = vsel %vm244, %v230, 0.0
    %vm246 = vcmp.ge.s32.totalorder %v20, 1
    %247 = vrot.lane.b32.xlu0 %v245, 1
    %v248 = vpop.permute.xlu0 %247
    %v249 = vsel %vm246, %v248, 0.0
    %v250 = vmax.f32 %v245, %v249
    %vm251 = vcmp.ge.s32.totalorder %v20, 2
    %252 = vrot.lane.b32.xlu0 %v250, 2
    %v253 = vpop.permute.xlu0 %252
    %v254 = vsel %vm251, %v253, 0.0
    %v255 = vmax.f32 %v250, %v254
    %vm256 = vcmp.ge.s32.totalorder %v20, 4
    %257 = vrot.lane.b32.xlu0 %v255, 4
    %v258 = vpop.permute.xlu0 %257
    %v259 = vsel %vm256, %v258, 0.0
    %v260 = vmax.f32 %v255, %v259
    %vm261 = vcmp.ge.s32.totalorder %v20, 8
    %262 = vrot.lane.b32.xlu0 %v260, 8
    %v263 = vpop.permute.xlu0 %262
    %v264 = vsel %vm261, %v263, 0.0
    %v265 = vmax.f32 %v260, %v264
    %vm266 = vcmp.ge.s32.totalorder %v20, 16
    %267 = vrot.lane.b32.xlu0 %v265, 16
    %v268 = vpop.permute.xlu0 %267
    %v269 = vsel %vm266, %v268, 0.0
    %v270 = vmax.f32 %v265, %v269
    %vm271 = vcmp.ge.s32.totalorder %v20, 32
    %272 = vrot.lane.b32.xlu0 %v270, 32
    %v273 = vpop.permute.xlu0 %272
    %v274 = vsel %vm271, %v273, 0.0
    %v275 = vmax.f32 %v270, %v274
    %vm276 = vcmp.ge.s32.totalorder %v20, 64
    %277 = vrot.lane.b32.xlu0 %v275, 64
    %v278 = vpop.permute.xlu0 %277
    %v279 = vsel %vm276, %v278, 0.0
    %v280 = vmax.f32 %v275, %v279
    %281 = vrot.lane.b32.xlu0 %v280, 1
    %v282 = vpop.permute.xlu0 %281
    %v283 = vsel %vm246, %v282, 0.0
    %285 = vset.pattern.permute.xlu0 127
    %286 = vperm.xlu0 %285, %v280
    %v287 = vpop.permute.xlu0 %286
    %vm289 = vcmp.ge.s32.totalorder %v18, 1
    %v290 = vrot.slane %v287, 7
    %v291 = vsel %vm289, %v290, 0.0
    %v292 = vmax.f32 %v287, %v291
    %vm293 = vcmp.ge.s32.totalorder %v18, 2
    %v294 = vrot.slane %v292, 6
    %v295 = vsel %vm293, %v294, 0.0
    %v296 = vmax.f32 %v292, %v295
    %vm297 = vcmp.ge.s32.totalorder %v18, 4
    %v298 = vrot.slane %v296, 4
    %v299 = vsel %vm297, %v298, 0.0
    %v300 = vmax.f32 %v296, %v299
    %v301 = vrot.slane %v300, 7
    %v302 = vsel %vm289, %v301, 0.0
    %v303 = vmax.f32 %v283, %v302
    %v304 = vsub.f32 %v230, %v303
    %v305 = vmul.f32 %v304, %v233
    %v306 = vsel %vm244, %v305, 0.0
    %307 = vadd.xlane.f32.xlu0 %v306
    %v308 = vpop.xlane.xlu0 %307
    %v309 = vrot.slane %v308, 4
    %v310 = vadd.f32 %v308, %v309
    %v311 = vrot.slane %v310, 2
    %v312 = vadd.f32 %v310, %v311
    %v313 = vrot.slane %v312, 1
    %v314 = vadd.f32 %v312, %v313
    %s315 = vtos %v314
    %v316 = vmul.f32 %v14, %v27
    %317 = vadd.xlane.f32.xlu0 %v316
    %v318 = vpop.xlane.xlu0 %317
    %v319 = vrot.slane %v318, 4
    %v320 = vadd.f32 %v318, %v319
    %v321 = vrot.slane %v320, 2
    %v322 = vadd.f32 %v320, %v321
    %v323 = vrot.slane %v322, 1
    %v324 = vadd.f32 %v322, %v323
    %s325 = vtos %v324
    %326 = vadd.xlane.f32.xlu0 %v27
    %v327 = vpop.xlane.xlu0 %326
    %v328 = vrot.slane %v327, 4
    %v329 = vadd.f32 %v327, %v328
    %v330 = vrot.slane %v329, 2
    %v331 = vadd.f32 %v329, %v330
    %v332 = vrot.slane %v331, 1
    %v333 = vadd.f32 %v331, %v332
    %s334 = vtos %v333
    %s335 = ssub.f32 %s315, %s325
    %v336 = vstv %s334
    %v337 = vrcp.pop %v336
    %s338 = vtos %v337
    %s339 = smul.f32 %s335, %s338
    %s340 = scalar_lea.smem [#allocation3], 0
    %341 = sst [smem:[%s340]] %s339
    // Predicated region
    $region10: #{surv_loss.1} parent=1 // pred_check
      _
    $region11: #{surv_loss.1} parent=1 // pred_check_branch
      %343 = sbr.rel (0) target = $region13
    $region12: #{surv_loss.1} parent=1 // pred_region
      %s345 = ssub.s32 16, 16
      %346 = vsyncadd [#allocation4], %s345
      %349 = dma.smem_to_hbm [#allocation3], 16, %s2, [#allocation4]
    $region13: #{surv_loss.1} parent=1 // pred_fallthru
      _
    // Predicated region
    $region14: #{surv_loss.1} parent=1 // pred_check
      _
    $region15: #{surv_loss.1} parent=1 // pred_check_branch
      %351 = sbr.rel (0) target = $region17
    $region16: #{surv_loss.1} parent=1 // pred_region
      %352 = dma.done [#allocation4], 16
    $region17: #{surv_loss.1} parent=1 // pred_fallthru
      _
    %353 = sfence
    %354 = vsyncpa [#allocation4], 1

</llo_original>
